<compile_context>
chip_gen: v7x
topology: tpu7x:2x2x1
jax: 0.10.0
libtpu: 0.0.40
codegen_flags: <defaults>
</compile_context>

<pallas_src>
import functools

import jax
import jax.numpy as jnp
from jax.experimental import pallas as pl
from jax.experimental.pallas import tpu as pltpu

# ---------------- model config (small shapes consistent with the module) ----------------
BATCH = 2       # batch size
SEQ = 16        # sequence length L (pooled over)
IN_DIM = 16     # input_dim  (channels of the input, last dim of x)
OUT_DIM = 32    # output_dim
BN_EPS = 1e-5


def _round_up(n, m):
    return ((n + m - 1) // m) * m


def _const_layout(c_in, c_out, batch, seq_len):
    """Row layout of the packed constants slab. Every tensor starts on an 8-row boundary
    and at lane 0, so in-kernel static slices never straddle a sublane tile start."""
    width = max(c_in, c_out, batch * seq_len)
    offs = {}
    row = 0

    def add(name, nrows):
        nonlocal row
        offs[name] = row
        row += _round_up(nrows, 8)

    add('w1', c_in)                 # (c_in, c_out)
    add('b1', 1)                    # (1, c_out)
    add('w2_0', c_out)              # k=3 conv #1, tap -1   (c_out, c_out)
    add('w2_1', c_out)              # tap 0
    add('w2_2', c_out)              # tap +1
    add('b2', 1)
    add('w3_0', c_out)              # k=3 conv #2
    add('w3_1', c_out)
    add('w3_2', c_out)
    add('b3', 1)
    add('pool', batch)              # (batch, batch*seq_len) averaging matrix
    return offs, row, width


def resnet_kernel(x_ref, c_ref, o_ref, *, seq_len, c_in, c_out, batch, offs):
    """Fused forward pass for the whole (tiny) batch in a single invocation.

    x_ref: (B*L, C_in)  channels-last rows
    c_ref: (N, W)       packed constants slab (weights / biases / pooling matrix)
    o_ref: (B, C_out)
    """
    BL = x_ref.shape[0]
    L = seq_len

    def cst(name, rows, cols):
        r0 = offs[name]                       # static Python int -> free view
        return c_ref[r0:r0 + rows, :cols]

    x = x_ref[...]

    # conv1 (kernel_size=1): a single matmul over the channel (lane) dim.
    h = jnp.dot(x, cst('w1', c_in, c_out),
                preferred_element_type=jnp.float32) + cst('b1', 1, c_out)
    residual = h

    # Row masks implementing Conv1d zero padding and batch-boundary isolation. The rolled
    # wraparound rows are exactly the masked rows, so pltpu.roll is safe here.
    row = jax.lax.broadcasted_iota(jnp.int32, (BL, 1), 0)
    has_prev = (row % L) != 0
    has_next = (row % L) != (L - 1)

    def conv3(a, wname, bname):
        # kernel_size=3, padding=1 as three shifted matmuls (BN already folded into w/b).
        # Tap shifts via XLU sublane rotation instead of misaligned concatenates.
        a_prev = jnp.where(has_prev, pltpu.roll(a, shift=1, axis=0), 0.0)
        a_next = jnp.where(has_next, pltpu.roll(a, shift=BL - 1, axis=0), 0.0)
        # NOTE: the three taps could be fused into one (BL, 3*C) x (3*C, C) matmul if this
        # ever becomes MXU-bound; at C=32 the extra lane-stack writes are not worth it.
        out = (jnp.dot(a_prev, cst(wname + '_0', c_out, c_out), preferred_element_type=jnp.float32)
               + jnp.dot(a, cst(wname + '_1', c_out, c_out), preferred_element_type=jnp.float32)
               + jnp.dot(a_next, cst(wname + '_2', c_out, c_out), preferred_element_type=jnp.float32))
        return out + cst(bname, 1, c_out)

    # res_block: ReLU -> conv3(+BN1) -> ReLU -> conv3(+BN2)
    h1 = conv3(jnp.maximum(h, 0.0), 'w2', 'b2')
    h2 = conv3(jnp.maximum(h1, 0.0), 'w3', 'b3')

    res = h2 + residual                                      # (B*L, C_out)

    # Global average pool over L: one small MXU matmul with the precomputed pooling matrix.
    pool = cst('pool', batch, BL)                            # (B, B*L)
    o_ref[...] = jnp.dot(pool, res, preferred_element_type=jnp.float32)


@functools.partial(jax.jit, static_argnames=('c_out',))
def resnet_forward(x, consts, *, c_out):
    """x: (B, L, input_dim) — the module's native input layout (no transpose needed)."""
    # TODO(synk): optional `mask` argument of the PyTorch forward is not implemented
    # (the module is exercised with mask=None).
    # TODO(synk): if this module is called many times per step, stack the calls into one
    # larger batch before invoking this wrapper — launch overhead dominates at these sizes.
    B, L, c_in = x.shape
    offs, _, _ = _const_layout(c_in, c_out, B, L)
    x_rows = x.reshape(B * L, c_in)          # pure bitcast: row-major (B,L,C) == (B*L, C)

    return pl.pallas_call(
        functools.partial(resnet_kernel, seq_len=L, c_in=c_in, c_out=c_out,
                          batch=B, offs=offs),
        out_shape=jax.ShapeDtypeStruct((B, c_out), jnp.float32),
    )(x_rows, consts)


# ---------------- parameters ----------------
def init_raw_params(key):
    """PyTorch-shaped parameters: Conv1d weights (O, I, K), biases (O,),
    BatchNorm1d gamma/beta + running stats (eval-mode semantics)."""
    ks = jax.random.split(key, 14)
    w1 = 0.2 * jax.random.normal(ks[0], (OUT_DIM, IN_DIM, 1), jnp.float32)
    b1 = 0.1 * jax.random.normal(ks[1], (OUT_DIM,), jnp.float32)
    w2 = 0.2 * jax.random.normal(ks[2], (OUT_DIM, OUT_DIM, 3), jnp.float32)
    b2 = 0.1 * jax.random.normal(ks[3], (OUT_DIM,), jnp.float32)
    w3 = 0.2 * jax.random.normal(ks[4], (OUT_DIM, OUT_DIM, 3), jnp.float32)
    b3 = 0.1 * jax.random.normal(ks[5], (OUT_DIM,), jnp.float32)
    g1 = 1.0 + 0.1 * jax.random.normal(ks[6], (OUT_DIM,), jnp.float32)
    bt1 = 0.1 * jax.random.normal(ks[7], (OUT_DIM,), jnp.float32)
    m1 = 0.1 * jax.random.normal(ks[8], (OUT_DIM,), jnp.float32)
    v1 = 1.0 + 0.1 * jnp.abs(jax.random.normal(ks[9], (OUT_DIM,), jnp.float32))
    g2 = 1.0 + 0.1 * jax.random.normal(ks[10], (OUT_DIM,), jnp.float32)
    bt2 = 0.1 * jax.random.normal(ks[11], (OUT_DIM,), jnp.float32)
    m2 = 0.1 * jax.random.normal(ks[12], (OUT_DIM,), jnp.float32)
    v2 = 1.0 + 0.1 * jnp.abs(jax.random.normal(ks[13], (OUT_DIM,), jnp.float32))
    return (w1, b1, w2, b2, w3, b3, g1, bt1, m1, v1, g2, bt2, m2, v2)


def prepare_kernel_params(raw, batch, seq_len):
    """Fold eval-mode BatchNorm into the conv weights/biases, pre-transpose for channels-last
    matmuls, precompute the pooling matrix, and pack everything into ONE constants slab."""
    # TODO(synk): training-mode BatchNorm (batch statistics) is not implemented.
    (w1, b1, w2, b2, w3, b3, g1, bt1, m1, v1, g2, bt2, m2, v2) = raw
    c_out, c_in = w1.shape[0], w1.shape[1]

    def fold_bn(w, b, gamma, beta, mean, var):
        scale = gamma / jnp.sqrt(var + BN_EPS)               # per output channel
        return w * scale[:, None, None], (b - mean) * scale + beta

    w2f, b2f = fold_bn(w2, b2, g1, bt1, m1, v1)
    w3f, b3f = fold_bn(w3, b3, g2, bt2, m2, v2)

    w1_t = jnp.transpose(w1[:, :, 0])                        # (C_in, C_out)
    w2_t = jnp.transpose(w2f, (2, 1, 0))                     # (3, C_out, C_out), tap-major
    w3_t = jnp.transpose(w3f, (2, 1, 0))

    # Pooling matrix: (B, B*L), 1/L where the column belongs to this batch element.
    col = jnp.arange(batch * seq_len)
    pool = jnp.where((col[None, :] // seq_len) == jnp.arange(batch)[:, None],
                     1.0 / seq_len, 0.0).astype(jnp.float32)

    offs, total_rows, width = _const_layout(c_in, c_out, batch, seq_len)
    slab = jnp.zeros((total_rows, width), jnp.float32)

    def put(slab, name, mat):
        r, c = mat.shape
        return slab.at[offs[name]:offs[name] + r, :c].set(mat)

    slab = put(slab, 'w1', w1_t)
    slab = put(slab, 'b1', b1.reshape(1, -1))
    slab = put(slab, 'w2_0', w2_t[0])
    slab = put(slab, 'w2_1', w2_t[1])
    slab = put(slab, 'w2_2', w2_t[2])
    slab = put(slab, 'b2', b2f.reshape(1, -1))
    slab = put(slab, 'w3_0', w3_t[0])
    slab = put(slab, 'w3_1', w3_t[1])
    slab = put(slab, 'w3_2', w3_t[2])
    slab = put(slab, 'b3', b3f.reshape(1, -1))
    slab = put(slab, 'pool', pool)
    return slab


# ---------------- pure-JAX reference (mirrors the PyTorch module, eval mode) ----------------
def reference_forward(x, raw):
    (w1, b1, w2, b2, w3, b3, g1, bt1, m1, v1, g2, bt2, m2, v2) = raw
    xt = jnp.transpose(x, (0, 2, 1))                                   # (B, C_in, L)
    h = jnp.einsum('oi,bil->bol', w1[:, :, 0], xt) + b1[None, :, None]
    residual = h

    def conv3(a, w, b):
        L = a.shape[-1]
        ap = jnp.pad(a, ((0, 0), (0, 0), (1, 1)))
        out = sum(jnp.einsum('oi,bil->bol', w[:, :, k], ap[:, :, k:k + L])
                  for k in range(3))
        return out + b[None, :, None]

    def bn(h, gamma, beta, mean, var):
        return ((h - mean[None, :, None]) / jnp.sqrt(var[None, :, None] + BN_EPS)
                * gamma[None, :, None] + beta[None, :, None])

    h1 = bn(conv3(jnp.maximum(h, 0.0), w2, b2), g1, bt1, m1, v1)
    h2 = bn(conv3(jnp.maximum(h1, 0.0), w3, b3), g2, bt2, m2, v2)
    out = h2 + residual
    return jnp.mean(out, axis=-1)                                      # (B, C_out)


if __name__ == "__main__":
    key = jax.random.PRNGKey(0)
    kx, kp = jax.random.split(key)

    # module's native input layout: (batch, seq_len, input_dim)
    x = jax.random.normal(kx, (BATCH, SEQ, IN_DIM), jnp.float32)
    raw = init_raw_params(kp)
    consts = prepare_kernel_params(raw, BATCH, SEQ)

    out = resnet_forward(x, consts, c_out=OUT_DIM)
    out = jax.block_until_ready(out)

    ref = reference_forward(x, raw)
    assert out.shape == (BATCH, OUT_DIM)
    assert jnp.allclose(out, ref, atol=1e-4, rtol=1e-4), "mismatch vs JAX reference"

    print("KERNEL_OK")
</pallas_src>

<mosaic_0001>
module attributes {stable_mosaic.version = 11 : i64} {
  func.func @resnet_kernel(%arg0: memref<32x16xf32, #tpu.memory_space<vmem>>, %arg1: memref<240x32xf32, #tpu.memory_space<vmem>>, %arg2: memref<2x32xf32, #tpu.memory_space<vmem>>) attributes {dimension_semantics = [], scalar_prefetch = 0 : i64, scratch_operands = 0 : i64, tpu.core_type = #tpu.core_type<tc>} {
    %c0 = arith.constant 0 : index
    %c0_0 = arith.constant 0 : index
    %0 = vector.load %arg0[%c0, %c0_0] : memref<32x16xf32, #tpu.memory_space<vmem>>, vector<32x16xf32>
    %c0_1 = arith.constant 0 : index
    %c0_2 = arith.constant 0 : index
    %1 = vector.load %arg1[%c0_1, %c0_2] : memref<240x32xf32, #tpu.memory_space<vmem>>, vector<16x32xf32>
    %cst = arith.constant dense<0.000000e+00> : vector<32x32xf32>
    %2 = tpu.matmul %0, %1, %cst {dimension_numbers = #tpu.dot_dimension_numbers<[1], [0], [0], [1], [0, 0, 1, 1], [], []>} : vector<32x16xf32>, vector<16x32xf32>, vector<32x32xf32> -> vector<32x32xf32>
    %c16 = arith.constant 16 : index
    %c0_3 = arith.constant 0 : index
    %3 = vector.load %arg1[%c16, %c0_3] : memref<240x32xf32, #tpu.memory_space<vmem>>, vector<1x32xf32>
    %4 = vector.broadcast %3 : vector<1x32xf32> to vector<32x32xf32>
    %5 = arith.addf %2, %4 : vector<32x32xf32>
    %6 = tpu.iota {dimensions = array<i32: 0>} : vector<32x1xi32>
    %c16_i32 = arith.constant 16 : i32
    %c0_i32 = arith.constant 0 : i32
    %7 = arith.cmpi eq, %c16_i32, %c0_i32 : i32
    %c1_i32 = arith.constant 1 : i32
    %8 = arith.select %7, %c1_i32, %c16_i32 : i32
    %9 = vector.broadcast %8 : i32 to vector<32x1xi32>
    %10 = arith.remsi %6, %9 : vector<32x1xi32>
    %c0_i32_4 = arith.constant 0 : i32
    %11 = vector.broadcast %c0_i32_4 : i32 to vector<32x1xi32>
    %12 = arith.cmpi ne, %10, %11 : vector<32x1xi32>
    %c0_i32_5 = arith.constant 0 : i32
    %13 = vector.broadcast %c0_i32_5 : i32 to vector<32x1xi32>
    %14 = arith.cmpi slt, %10, %13 : vector<32x1xi32>
    %c0_i32_6 = arith.constant 0 : i32
    %15 = arith.cmpi slt, %8, %c0_i32_6 : i32
    %16 = vector.broadcast %15 : i1 to vector<32x1xi1>
    %17 = vector.broadcast %16 : vector<32x1xi1> to vector<32x1xi1>
    %18 = arith.xori %14, %17 : vector<32x1xi1>
    %19 = arith.andi %18, %12 : vector<32x1xi1>
    %20 = vector.broadcast %8 : i32 to vector<32x1xi32>
    %21 = arith.addi %10, %20 : vector<32x1xi32>
    %22 = arith.select %19, %21, %10 : vector<32x1xi1>, vector<32x1xi32>
    %c0_i32_7 = arith.constant 0 : i32
    %23 = vector.broadcast %c0_i32_7 : i32 to vector<32x1xi32>
    %24 = arith.cmpi ne, %22, %23 : vector<32x1xi32>
    %c16_i32_8 = arith.constant 16 : i32
    %c0_i32_9 = arith.constant 0 : i32
    %25 = arith.cmpi eq, %c16_i32_8, %c0_i32_9 : i32
    %c1_i32_10 = arith.constant 1 : i32
    %26 = arith.select %25, %c1_i32_10, %c16_i32_8 : i32
    %27 = vector.broadcast %26 : i32 to vector<32x1xi32>
    %28 = arith.remsi %6, %27 : vector<32x1xi32>
    %c0_i32_11 = arith.constant 0 : i32
    %29 = vector.broadcast %c0_i32_11 : i32 to vector<32x1xi32>
    %30 = arith.cmpi ne, %28, %29 : vector<32x1xi32>
    %c0_i32_12 = arith.constant 0 : i32
    %31 = vector.broadcast %c0_i32_12 : i32 to vector<32x1xi32>
    %32 = arith.cmpi slt, %28, %31 : vector<32x1xi32>
    %c0_i32_13 = arith.constant 0 : i32
    %33 = arith.cmpi slt, %26, %c0_i32_13 : i32
    %34 = vector.broadcast %33 : i1 to vector<32x1xi1>
    %35 = vector.broadcast %34 : vector<32x1xi1> to vector<32x1xi1>
    %36 = arith.xori %32, %35 : vector<32x1xi1>
    %37 = arith.andi %36, %30 : vector<32x1xi1>
    %38 = vector.broadcast %26 : i32 to vector<32x1xi32>
    %39 = arith.addi %28, %38 : vector<32x1xi32>
    %40 = arith.select %37, %39, %28 : vector<32x1xi1>, vector<32x1xi32>
    %c15_i32 = arith.constant 15 : i32
    %41 = vector.broadcast %c15_i32 : i32 to vector<32x1xi32>
    %42 = arith.cmpi ne, %40, %41 : vector<32x1xi32>
    %cst_14 = arith.constant 0.000000e+00 : f32
    %43 = vector.broadcast %cst_14 : f32 to vector<32x32xf32>
    %44 = arith.maximumf %5, %43 : vector<32x32xf32>
    %c1_i32_15 = arith.constant 1 : i32
    %45 = tpu.dynamic_rotate %44 by %c1_i32_15 dim 0 : vector<32x32xf32>, i32 -> vector<32x32xf32>
    %cst_16 = arith.constant 0.000000e+00 : f32
    %46 = vector.shape_cast %24 : vector<32x1xi1> to vector<32x1xi1>
    %47 = vector.broadcast %46 : vector<32x1xi1> to vector<32x32xi1>
    %48 = vector.broadcast %cst_16 : f32 to vector<32x32xf32>
    %49 = arith.select %47, %45, %48 : vector<32x32xi1>, vector<32x32xf32>
    %c31_i32 = arith.constant 31 : i32
    %50 = tpu.dynamic_rotate %44 by %c31_i32 dim 0 : vector<32x32xf32>, i32 -> vector<32x32xf32>
    %cst_17 = arith.constant 0.000000e+00 : f32
    %51 = vector.shape_cast %42 : vector<32x1xi1> to vector<32x1xi1>
    %52 = vector.broadcast %51 : vector<32x1xi1> to vector<32x32xi1>
    %53 = vector.broadcast %cst_17 : f32 to vector<32x32xf32>
    %54 = arith.select %52, %50, %53 : vector<32x32xi1>, vector<32x32xf32>
    %c24 = arith.constant 24 : index
    %c0_18 = arith.constant 0 : index
    %55 = vector.load %arg1[%c24, %c0_18] : memref<240x32xf32, #tpu.memory_space<vmem>>, vector<32x32xf32>
    %cst_19 = arith.constant dense<0.000000e+00> : vector<32x32xf32>
    %56 = tpu.matmul %49, %55, %cst_19 {dimension_numbers = #tpu.dot_dimension_numbers<[1], [0], [0], [1], [0, 0, 1, 1], [], []>} : vector<32x32xf32>, vector<32x32xf32>, vector<32x32xf32> -> vector<32x32xf32>
    %c56 = arith.constant 56 : index
    %c0_20 = arith.constant 0 : index
    %57 = vector.load %arg1[%c56, %c0_20] : memref<240x32xf32, #tpu.memory_space<vmem>>, vector<32x32xf32>
    %cst_21 = arith.constant dense<0.000000e+00> : vector<32x32xf32>
    %58 = tpu.matmul %44, %57, %cst_21 {dimension_numbers = #tpu.dot_dimension_numbers<[1], [0], [0], [1], [0, 0, 1, 1], [], []>} : vector<32x32xf32>, vector<32x32xf32>, vector<32x32xf32> -> vector<32x32xf32>
    %59 = arith.addf %56, %58 : vector<32x32xf32>
    %c88 = arith.constant 88 : index
    %c0_22 = arith.constant 0 : index
    %60 = vector.load %arg1[%c88, %c0_22] : memref<240x32xf32, #tpu.memory_space<vmem>>, vector<32x32xf32>
    %cst_23 = arith.constant dense<0.000000e+00> : vector<32x32xf32>
    %61 = tpu.matmul %54, %60, %cst_23 {dimension_numbers = #tpu.dot_dimension_numbers<[1], [0], [0], [1], [0, 0, 1, 1], [], []>} : vector<32x32xf32>, vector<32x32xf32>, vector<32x32xf32> -> vector<32x32xf32>
    %62 = arith.addf %59, %61 : vector<32x32xf32>
    %c120 = arith.constant 120 : index
    %c0_24 = arith.constant 0 : index
    %63 = vector.load %arg1[%c120, %c0_24] : memref<240x32xf32, #tpu.memory_space<vmem>>, vector<1x32xf32>
    %64 = vector.broadcast %63 : vector<1x32xf32> to vector<32x32xf32>
    %65 = arith.addf %62, %64 : vector<32x32xf32>
    %cst_25 = arith.constant 0.000000e+00 : f32
    %66 = vector.broadcast %cst_25 : f32 to vector<32x32xf32>
    %67 = arith.maximumf %65, %66 : vector<32x32xf32>
    %c1_i32_26 = arith.constant 1 : i32
    %68 = tpu.dynamic_rotate %67 by %c1_i32_26 dim 0 : vector<32x32xf32>, i32 -> vector<32x32xf32>
    %cst_27 = arith.constant 0.000000e+00 : f32
    %69 = vector.shape_cast %24 : vector<32x1xi1> to vector<32x1xi1>
    %70 = vector.broadcast %69 : vector<32x1xi1> to vector<32x32xi1>
    %71 = vector.broadcast %cst_27 : f32 to vector<32x32xf32>
    %72 = arith.select %70, %68, %71 : vector<32x32xi1>, vector<32x32xf32>
    %c31_i32_28 = arith.constant 31 : i32
    %73 = tpu.dynamic_rotate %67 by %c31_i32_28 dim 0 : vector<32x32xf32>, i32 -> vector<32x32xf32>
    %cst_29 = arith.constant 0.000000e+00 : f32
    %74 = vector.shape_cast %42 : vector<32x1xi1> to vector<32x1xi1>
    %75 = vector.broadcast %74 : vector<32x1xi1> to vector<32x32xi1>
    %76 = vector.broadcast %cst_29 : f32 to vector<32x32xf32>
    %77 = arith.select %75, %73, %76 : vector<32x32xi1>, vector<32x32xf32>
    %c128 = arith.constant 128 : index
    %c0_30 = arith.constant 0 : index
    %78 = vector.load %arg1[%c128, %c0_30] : memref<240x32xf32, #tpu.memory_space<vmem>>, vector<32x32xf32>
    %cst_31 = arith.constant dense<0.000000e+00> : vector<32x32xf32>
    %79 = tpu.matmul %72, %78, %cst_31 {dimension_numbers = #tpu.dot_dimension_numbers<[1], [0], [0], [1], [0, 0, 1, 1], [], []>} : vector<32x32xf32>, vector<32x32xf32>, vector<32x32xf32> -> vector<32x32xf32>
    %c160 = arith.constant 160 : index
    %c0_32 = arith.constant 0 : index
    %80 = vector.load %arg1[%c160, %c0_32] : memref<240x32xf32, #tpu.memory_space<vmem>>, vector<32x32xf32>
    %cst_33 = arith.constant dense<0.000000e+00> : vector<32x32xf32>
    %81 = tpu.matmul %67, %80, %cst_33 {dimension_numbers = #tpu.dot_dimension_numbers<[1], [0], [0], [1], [0, 0, 1, 1], [], []>} : vector<32x32xf32>, vector<32x32xf32>, vector<32x32xf32> -> vector<32x32xf32>
    %82 = arith.addf %79, %81 : vector<32x32xf32>
    %c192 = arith.constant 192 : index
    %c0_34 = arith.constant 0 : index
    %83 = vector.load %arg1[%c192, %c0_34] : memref<240x32xf32, #tpu.memory_space<vmem>>, vector<32x32xf32>
    %cst_35 = arith.constant dense<0.000000e+00> : vector<32x32xf32>
    %84 = tpu.matmul %77, %83, %cst_35 {dimension_numbers = #tpu.dot_dimension_numbers<[1], [0], [0], [1], [0, 0, 1, 1], [], []>} : vector<32x32xf32>, vector<32x32xf32>, vector<32x32xf32> -> vector<32x32xf32>
    %85 = arith.addf %82, %84 : vector<32x32xf32>
    %c224 = arith.constant 224 : index
    %c0_36 = arith.constant 0 : index
    %86 = vector.load %arg1[%c224, %c0_36] : memref<240x32xf32, #tpu.memory_space<vmem>>, vector<1x32xf32>
    %87 = vector.broadcast %86 : vector<1x32xf32> to vector<32x32xf32>
    %88 = arith.addf %85, %87 : vector<32x32xf32>
    %89 = arith.addf %88, %5 : vector<32x32xf32>
    %c232 = arith.constant 232 : index
    %c0_37 = arith.constant 0 : index
    %90 = vector.load %arg1[%c232, %c0_37] : memref<240x32xf32, #tpu.memory_space<vmem>>, vector<2x32xf32>
    %cst_38 = arith.constant dense<0.000000e+00> : vector<2x32xf32>
    %91 = tpu.matmul %90, %89, %cst_38 {dimension_numbers = #tpu.dot_dimension_numbers<[1], [0], [0], [1], [0, 0, 1, 1], [], []>} : vector<2x32xf32>, vector<32x32xf32>, vector<2x32xf32> -> vector<2x32xf32>
    %c0_39 = arith.constant 0 : index
    %c0_40 = arith.constant 0 : index
    %92 = vector.load %arg2[%c0_39, %c0_40] : memref<2x32xf32, #tpu.memory_space<vmem>>, vector<2x32xf32>
    tpu.vector_store %arg2[%c0_39, %c0_40], %91 {strides = array<i32>} : memref<2x32xf32, #tpu.memory_space<vmem>>, vector<2x32xf32>,
    return
  }
}

</mosaic_0001>

<llo_original>
// kernel: resnet_forward.1
$region0: #{resnet_forward.1}
  #allocation0 [shape = 'u32[]', space=smem, size = 0x4, offset = 0x4, fixed_abs, tag = 'smem constant byte address 0x4 - core index']
  #allocation1 [shape = 'u32[144,128]{1,0:T(1,128)}', space=vmem, size = 0x12000, scoped, tag = 'internal scratch']
  %s0 = inlined_call_operand.vmem [shape: f32[32,16], index: 0, kind: input, shape index: {}]
  %s1 = inlined_call_operand.vmem [shape: f32[240,32], index: 1, kind: input, shape index: {}]
  %s2 = inlined_call_operand.hbm [shape: f32[2,32], index: 2, kind: output, shape index: {}]
  %s3 = sld [smem:[#allocation0]]
  $region18: #{resnet_forward.1} parent=0
    _
  %s5 = ssub.s32 1, %s3
  %s6 = scalar_select 0, %s5, %s3
  $region1: #{resnet_forward.1} parent=0
    #allocation2 [shape = 'u8[1024]{0}', space=vmem, size = 0x400, scoped, tag = 'output window, operand 0, single buffered']
    #allocation3 [shape = 's32[1]{0}', space=sflag, size = 0x4, scoped, tag = 'scoped memory for resnet_forward.1']
    %7 = vsyncpa [#allocation3], 0
    // Predicated region
    $region2: #{resnet_forward.1} parent=1 // pred_check
      _
    $region3: #{resnet_forward.1} parent=1 // pred_check_branch
      %9 = sbr.rel (0) target = $region5
    $region4: #{resnet_forward.1} parent=1 // pred_region
      _
    $region5: #{resnet_forward.1} parent=1 // pred_fallthru
      _
    // Predicated region
    $region6: #{resnet_forward.1} parent=1 // pred_check
      _
    $region7: #{resnet_forward.1} parent=1 // pred_check_branch
      %11 = sbr.rel (0) target = $region9
    $region8: #{resnet_forward.1} parent=1 // pred_region
      _
    $region9: #{resnet_forward.1} parent=1 // pred_fallthru
      _
    %v12 = vld [vmem:[%s0] sm:$0xff]
    %v13 = vld [vmem:[%s0 + $0x8] sm:$0xff]
    %v14 = vld [vmem:[%s0 + $0x10] sm:$0xff]
    %v15 = vld [vmem:[%s0 + $0x18] sm:$0xff]
    %v16 = vld [vmem:[%s1] sm:$0xff]
    %v17 = vld [vmem:[%s1 + $0x8] sm:$0xff]
    %v18 = vld [vmem:[%s1 + $0x10] sm:$0x1]
    %v19 = vlaneseq
    %v20 = vshrl.u32 %v19, 7
    %v21 = vsub.s32 0, %v20
    %v22 = vrot.slane %v18, %v21
    %vm23 = vcmask 130048
    %v25 = vsel %vm23, %v12, 0
    %v28 = vsel %vm23, %v13, 0
    %v31 = vsel %vm23, %v14, 0
    %v34 = vsel %vm23, %v15, 0
    %36 = vmatprep.subr.mxu0 0.0
    %37 = vmatpush1.msra.mxu0 %v16
    %38 = vmatprep.subr.mxu0 0.0
    %39 = vmatpush1.msra.mxu0 %v17
    %40 = vmatprep.subr.mxu0 0.0
    %41 = vmatpush1.msra.mxu0 0.0
    %42 = vmatprep.subr.mxu0 0.0
    %43 = vmatpush1.msra.mxu0 0.0
    %44 = vmatprep.subr.mxu0 0.0
    %45 = vmatpush1.msra.mxu0 0.0
    %46 = vmatprep.subr.mxu0 0.0
    %47 = vmatpush1.msra.mxu0 0.0
    %48 = vmatprep.subr.mxu0 0.0
    %49 = vmatpush1.msra.mxu0 0.0
    %50 = vmatprep.subr.mxu0 0.0
    %51 = vmatpush1.msra.mxu0 0.0
    %52 = vmatprep.subr.mxu0 0.0
    %53 = vmatpush1.msra.mxu0 0.0
    %54 = vmatprep.subr.mxu0 0.0
    %55 = vmatpush1.msra.mxu0 0.0
    %56 = vmatprep.subr.mxu0 0.0
    %57 = vmatpush1.msra.mxu0 0.0
    %58 = vmatprep.subr.mxu0 0.0
    %59 = vmatpush1.msra.mxu0 0.0
    %60 = vmatprep.subr.mxu0 0.0
    %61 = vmatpush1.msra.mxu0 0.0
    %62 = vmatprep.subr.mxu0 0.0
    %63 = vmatpush1.msra.mxu0 0.0
    %64 = vmatprep.subr.mxu0 0.0
    %65 = vmatpush1.msra.mxu0 0.0
    %66 = vmatprep.subr.mxu0 0.0
    %67 = vmatpush1.msra.mxu0 0.0
    %68 = vmatprep.subr.mxu0 0.0
    %69 = vmatpush1.msra.mxu0 0.0
    %70 = vmatprep.subr.mxu0 0.0
    %71 = vmatpush1.msra.mxu0 0.0
    %72 = vmatprep.subr.mxu0 0.0
    %73 = vmatpush1.msra.mxu0 0.0
    %74 = vmatprep.subr.mxu0 0.0
    %75 = vmatpush1.msra.mxu0 0.0
    %76 = vmatprep.subr.mxu0 0.0
    %77 = vmatpush1.msra.mxu0 0.0
    %78 = vmatprep.subr.mxu0 0.0
    %79 = vmatpush1.msra.mxu0 0.0
    %80 = vmatprep.subr.mxu0 0.0
    %81 = vmatpush1.msra.mxu0 0.0
    %82 = vmatprep.subr.mxu0 0.0
    %83 = vmatpush1.msra.mxu0 0.0
    %84 = vmatprep.subr.mxu0 0.0
    %85 = vmatpush1.msra.mxu0 0.0
    %86 = vmatprep.subr.mxu0 0.0
    %87 = vmatpush1.msra.mxu0 0.0
    %88 = vmatprep.subr.mxu0 0.0
    %89 = vmatpush1.msra.mxu0 0.0
    %90 = vmatprep.subr.mxu0 0.0
    %91 = vmatpush1.msra.mxu0 0.0
    %92 = vmatprep.subr.mxu0 0.0
    %93 = vmatpush1.msra.mxu0 0.0
    %94 = vmatprep.subr.mxu0 0.0
    %95 = vmatpush1.msra.mxu0 0.0
    %96 = vmatprep.subr.mxu0 0.0
    %97 = vmatpush1.msra.mxu0 0.0
    %98 = vmatprep.subr.mxu0 0.0
    %99 = vmatpush1.msra.mxu0 0.0
    %100 = vmatprep.mubr.f32.mxu0 0.0
    %101 = vmatmul.mubr.f32.gmra.mrb[0].mxu0 %v25
    %v102 = vpop.f32.mrb[0].mxu0
    %v103 = vadd.f32 %v22, %v102
    %v104 = vpop.f32.mrb[0].mxu0
    %105 = vmatprep.mubr.f32.mxu0 0.0
    %106 = vmatmul.mubr.f32.gmra.mrb[0].mxu0 %v28
    %v107 = vpop.f32.mrb[0].mxu0
    %v108 = vadd.f32 %v22, %v107
    %v109 = vpop.f32.mrb[0].mxu0
    %110 = vmatprep.mubr.f32.mxu0 0.0
    %111 = vmatmul.mubr.f32.gmra.mrb[0].mxu0 %v31
    %v112 = vpop.f32.mrb[0].mxu0
    %v113 = vadd.f32 %v22, %v112
    %v114 = vpop.f32.mrb[0].mxu0
    %115 = vmatprep.mubr.f32.mxu0 0.0
    %116 = vmatmul.mubr.f32.gmra.mrb[0].mxu0 %v34
    %v117 = vpop.f32.mrb[0].mxu0
    %v118 = vadd.f32 %v22, %v117
    %v119 = vpop.f32.mrb[0].mxu0
    %120 = vdwg.mxu0
    %v121 = vlaneseq
    %v122 = vshrl.u32 %v121, 7
    %v123 = vadd.s32 %v122, 8
    %v124 = vadd.s32 %v122, 16
    %v125 = vadd.s32 %v122, 24
    %vm126 = vcmp.lt.s32.totalorder %v122, 0
    %v127 = vsub.s32 0, %v122
    %v128 = vsel %vm126, %v127, %v122
    %v129 = vshrl.u32 %v128, 4
    %v130 = vand.u32 %v128, 15
    %v131 = vsub.s32 0, %v130
    %v132 = vsel %vm126, %v131, %v130
    %vm133 = vcmp.lt.s32.totalorder %v123, 0
    %v134 = vsub.s32 0, %v123
    %v135 = vsel %vm133, %v134, %v123
    %v136 = vshrl.u32 %v135, 4
    %v137 = vand.u32 %v135, 15
    %v138 = vsub.s32 0, %v137
    %v139 = vsel %vm133, %v138, %v137
    %vm140 = vcmp.lt.s32.totalorder %v124, 0
    %v141 = vsub.s32 0, %v124
    %v142 = vsel %vm140, %v141, %v124
    %v143 = vshrl.u32 %v142, 4
    %v144 = vand.u32 %v142, 15
    %v145 = vsub.s32 0, %v144
    %v146 = vsel %vm140, %v145, %v144
    %vm147 = vcmp.lt.s32.totalorder %v125, 0
    %v148 = vsub.s32 0, %v125
    %v149 = vsel %vm147, %v148, %v125
    %v150 = vshrl.u32 %v149, 4
    %v151 = vand.u32 %v149, 15
    %v152 = vsub.s32 0, %v151
    %v153 = vsel %vm147, %v152, %v151
    %vm154 = vcmp.ne.s32.totalorder %v132, 0
    %vm155 = vcmp.ne.s32.totalorder %v139, 0
    %vm156 = vcmp.ne.s32.totalorder %v146, 0
    %vm157 = vcmp.ne.s32.totalorder %v153, 0
    %vm158 = vcmp.lt.s32.totalorder %v132, 0
    %vm159 = vcmp.lt.s32.totalorder %v139, 0
    %vm160 = vcmp.lt.s32.totalorder %v146, 0
    %vm161 = vcmp.lt.s32.totalorder %v153, 0
    %vm162 = vmand %vm158, %vm154
    %vm163 = vmand %vm159, %vm155
    %vm164 = vmand %vm160, %vm156
    %vm165 = vmand %vm161, %vm157
    %v166 = vadd.s32 %v132, 16
    %v167 = vadd.s32 %v139, 16
    %v168 = vadd.s32 %v146, 16
    %v169 = vadd.s32 %v153, 16
    %v170 = vsel %vm162, %v166, %v132
    %v171 = vsel %vm163, %v167, %v139
    %v172 = vsel %vm164, %v168, %v146
    %v173 = vsel %vm165, %v169, %v153
    %vm174 = vcmp.ne.s32.totalorder %v170, 0
    %vm175 = vcmp.ne.s32.totalorder %v171, 0
    %vm176 = vcmp.ne.s32.totalorder %v172, 0
    %vm177 = vcmp.ne.s32.totalorder %v173, 0
    %vm178 = vcmp.ne.s32.totalorder %v170, 15
    %vm179 = vcmp.ne.s32.totalorder %v171, 15
    %vm180 = vcmp.ne.s32.totalorder %v172, 15
    %vm181 = vcmp.ne.s32.totalorder %v173, 15
    %v182 = vmax.f32 %v103, 0.0
    %v183 = vmax.f32 %v108, 0.0
    %v184 = vmax.f32 %v113, 0.0
    %v185 = vmax.f32 %v118, 0.0
    %v186 = vrot.slane %v182, 7
    %v187 = vrot.slane %v183, 7
    %v188 = vrot.slane %v184, 7
    %v189 = vrot.slane %v185, 7
    %vm190 = vcmp.lt.s32.totalorder %v122, 1
    %v191 = vsel %vm190, %v188, %v189
    %v192 = vsel %vm190, %v187, %v188
    %v193 = vsel %vm190, %v186, %v187
    %v194 = vsel %vm190, %v189, %v186
    %v195 = vsel %vm174, 1, 0
    %v196 = vsel %vm175, 1, 0
    %v197 = vsel %vm176, 1, 0
    %v198 = vsel %vm177, 1, 0
    %vm199 = vcmp.eq.s32.totalorder %v195, 1
    %vm200 = vcmp.eq.s32.totalorder %v196, 1
    %vm201 = vcmp.eq.s32.totalorder %v197, 1
    %vm202 = vcmp.eq.s32.totalorder %v198, 1
    %v203 = vsel %vm199, %v194, 0.0
    %v204 = vsel %vm200, %v193, 0.0
    %v205 = vsel %vm201, %v192, 0.0
    %v206 = vsel %vm202, %v191, 0.0
    %v207 = vrot.slane %v182, 1
    %v208 = vrot.slane %v183, 1
    %v209 = vrot.slane %v184, 1
    %v210 = vrot.slane %v185, 1
    %vm211 = vcmp.lt.s32.totalorder %v122, 7
    %v212 = vsel %vm211, %v209, %v210
    %v213 = vsel %vm211, %v208, %v209
    %v214 = vsel %vm211, %v207, %v208
    %v215 = vsel %vm211, %v210, %v207
    %v216 = vsel %vm178, 1, 0
    %v217 = vsel %vm179, 1, 0
    %v218 = vsel %vm180, 1, 0
    %v219 = vsel %vm181, 1, 0
    %vm220 = vcmp.eq.s32.totalorder %v216, 1
    %vm221 = vcmp.eq.s32.totalorder %v217, 1
    %vm222 = vcmp.eq.s32.totalorder %v218, 1
    %vm223 = vcmp.eq.s32.totalorder %v219, 1
    %v224 = vsel %vm220, %v214, 0.0
    %v225 = vsel %vm221, %v213, 0.0
    %v226 = vsel %vm222, %v212, 0.0
    %v227 = vsel %vm223, %v215, 0.0
    %v228 = vld [vmem:[%s1 + $0x18] sm:$0xff]
    %v229 = vld [vmem:[%s1 + $0x20] sm:$0xff]
    %v230 = vld [vmem:[%s1 + $0x28] sm:$0xff]
    %v231 = vld [vmem:[%s1 + $0x30] sm:$0xff]
    %v232 = vld [vmem:[%s1 + $0x38] sm:$0xff]
    %v233 = vld [vmem:[%s1 + $0x40] sm:$0xff]
    %v234 = vld [vmem:[%s1 + $0x48] sm:$0xff]
    %v235 = vld [vmem:[%s1 + $0x50] sm:$0xff]
    %vm236 = vcmask 261120
    %v238 = vsel %vm236, %v182, 0
    %v241 = vsel %vm236, %v183, 0
    %v244 = vsel %vm236, %v184, 0
    %v247 = vsel %vm236, %v185, 0
    %249 = vmatprep.subr.mxu0 0.0
    %250 = vmatpush1.msra.mxu0 %v232
    %251 = vmatprep.subr.mxu0 0.0
    %252 = vmatpush1.msra.mxu0 %v233
    %253 = vmatprep.subr.mxu0 0.0
    %254 = vmatpush1.msra.mxu0 %v234
    %255 = vmatprep.subr.mxu0 0.0
    %256 = vmatpush1.msra.mxu0 %v235
    %257 = vmatprep.subr.mxu0 0.0
    %258 = vmatpush1.msra.mxu0 0.0
    %259 = vmatprep.subr.mxu0 0.0
    %260 = vmatpush1.msra.mxu0 0.0
    %261 = vmatprep.subr.mxu0 0.0
    %262 = vmatpush1.msra.mxu0 0.0
    %263 = vmatprep.subr.mxu0 0.0
    %264 = vmatpush1.msra.mxu0 0.0
    %265 = vmatprep.subr.mxu0 0.0
    %266 = vmatpush1.msra.mxu0 0.0
    %267 = vmatprep.subr.mxu0 0.0
    %268 = vmatpush1.msra.mxu0 0.0
    %269 = vmatprep.subr.mxu0 0.0
    %270 = vmatpush1.msra.mxu0 0.0
    %271 = vmatprep.subr.mxu0 0.0
    %272 = vmatpush1.msra.mxu0 0.0
    %273 = vmatprep.subr.mxu0 0.0
    %274 = vmatpush1.msra.mxu0 0.0
    %275 = vmatprep.subr.mxu0 0.0
    %276 = vmatpush1.msra.mxu0 0.0
    %277 = vmatprep.subr.mxu0 0.0
    %278 = vmatpush1.msra.mxu0 0.0
    %279 = vmatprep.subr.mxu0 0.0
    %280 = vmatpush1.msra.mxu0 0.0
    %281 = vmatprep.subr.mxu0 0.0
    %282 = vmatpush1.msra.mxu0 0.0
    %283 = vmatprep.subr.mxu0 0.0
    %284 = vmatpush1.msra.mxu0 0.0
    %285 = vmatprep.subr.mxu0 0.0
    %286 = vmatpush1.msra.mxu0 0.0
    %287 = vmatprep.subr.mxu0 0.0
    %288 = vmatpush1.msra.mxu0 0.0
    %289 = vmatprep.subr.mxu0 0.0
    %290 = vmatpush1.msra.mxu0 0.0
    %291 = vmatprep.subr.mxu0 0.0
    %292 = vmatpush1.msra.mxu0 0.0
    %293 = vmatprep.subr.mxu0 0.0
    %294 = vmatpush1.msra.mxu0 0.0
    %295 = vmatprep.subr.mxu0 0.0
    %296 = vmatpush1.msra.mxu0 0.0
    %297 = vmatprep.subr.mxu0 0.0
    %298 = vmatpush1.msra.mxu0 0.0
    %299 = vmatprep.subr.mxu0 0.0
    %300 = vmatpush1.msra.mxu0 0.0
    %301 = vmatprep.subr.mxu0 0.0
    %302 = vmatpush1.msra.mxu0 0.0
    %303 = vmatprep.subr.mxu0 0.0
    %304 = vmatpush1.msra.mxu0 0.0
    %305 = vmatprep.subr.mxu0 0.0
    %306 = vmatpush1.msra.mxu0 0.0
    %307 = vmatprep.subr.mxu0 0.0
    %308 = vmatpush1.msra.mxu0 0.0
    %309 = vmatprep.subr.mxu0 0.0
    %310 = vmatpush1.msra.mxu0 0.0
    %311 = vmatprep.subr.mxu0 0.0
    %312 = vmatpush1.msra.mxu0 0.0
    %313 = vmatprep.mubr.f32.mxu0 0.0
    %314 = vmatmul.mubr.f32.gmra.mrb[0].mxu0 %v238
    %v315 = vpop.f32.mrb[0].mxu0
    %v316 = vadd.f32 0.0, %v315
    %v317 = vpop.f32.mrb[0].mxu0
    %318 = vmatprep.mubr.f32.mxu0 0.0
    %319 = vmatmul.mubr.f32.gmra.mrb[0].mxu0 %v241
    %v320 = vpop.f32.mrb[0].mxu0
    %v321 = vadd.f32 0.0, %v320
    %v322 = vpop.f32.mrb[0].mxu0
    %323 = vmatprep.mubr.f32.mxu0 0.0
    %324 = vmatmul.mubr.f32.gmra.mrb[0].mxu0 %v244
    %v325 = vpop.f32.mrb[0].mxu0
    %v326 = vadd.f32 0.0, %v325
    %v327 = vpop.f32.mrb[0].mxu0
    %328 = vmatprep.mubr.f32.mxu0 0.0
    %329 = vmatmul.mubr.f32.gmra.mrb[0].mxu0 %v247
    %v330 = vpop.f32.mrb[0].mxu0
    %v331 = vadd.f32 0.0, %v330
    %v332 = vpop.f32.mrb[0].mxu0
    %333 = vdwg.mxu0
    %v335 = vsel %vm236, %v203, 0
    %v338 = vsel %vm236, %v204, 0
    %v341 = vsel %vm236, %v205, 0
    %v344 = vsel %vm236, %v206, 0
    %346 = vmatprep.subr.mxu0 0.0
    %347 = vmatpush1.msra.mxu0 %v228
    %348 = vmatprep.subr.mxu0 0.0
    %349 = vmatpush1.msra.mxu0 %v229
    %350 = vmatprep.subr.mxu0 0.0
    %351 = vmatpush1.msra.mxu0 %v230
    %352 = vmatprep.subr.mxu0 0.0
    %353 = vmatpush1.msra.mxu0 %v231
    %354 = vmatprep.subr.mxu0 0.0
    %355 = vmatpush1.msra.mxu0 0.0
    %356 = vmatprep.subr.mxu0 0.0
    %357 = vmatpush1.msra.mxu0 0.0
    %358 = vmatprep.subr.mxu0 0.0
    %359 = vmatpush1.msra.mxu0 0.0
    %360 = vmatprep.subr.mxu0 0.0
    %361 = vmatpush1.msra.mxu0 0.0
    %362 = vmatprep.subr.mxu0 0.0
    %363 = vmatpush1.msra.mxu0 0.0
    %364 = vmatprep.subr.mxu0 0.0
    %365 = vmatpush1.msra.mxu0 0.0
    %366 = vmatprep.subr.mxu0 0.0
    %367 = vmatpush1.msra.mxu0 0.0
    %368 = vmatprep.subr.mxu0 0.0
    %369 = vmatpush1.msra.mxu0 0.0
    %370 = vmatprep.subr.mxu0 0.0
    %371 = vmatpush1.msra.mxu0 0.0
    %372 = vmatprep.subr.mxu0 0.0
    %373 = vmatpush1.msra.mxu0 0.0
    %374 = vmatprep.subr.mxu0 0.0
    %375 = vmatpush1.msra.mxu0 0.0
    %376 = vmatprep.subr.mxu0 0.0
    %377 = vmatpush1.msra.mxu0 0.0
    %378 = vmatprep.subr.mxu0 0.0
    %379 = vmatpush1.msra.mxu0 0.0
    %380 = vmatprep.subr.mxu0 0.0
    %381 = vmatpush1.msra.mxu0 0.0
    %382 = vmatprep.subr.mxu0 0.0
    %383 = vmatpush1.msra.mxu0 0.0
    %384 = vmatprep.subr.mxu0 0.0
    %385 = vmatpush1.msra.mxu0 0.0
    %386 = vmatprep.subr.mxu0 0.0
    %387 = vmatpush1.msra.mxu0 0.0
    %388 = vmatprep.subr.mxu0 0.0
    %389 = vmatpush1.msra.mxu0 0.0
    %390 = vmatprep.subr.mxu0 0.0
    %391 = vmatpush1.msra.mxu0 0.0
    %392 = vmatprep.subr.mxu0 0.0
    %393 = vmatpush1.msra.mxu0 0.0
    %394 = vmatprep.subr.mxu0 0.0
    %395 = vmatpush1.msra.mxu0 0.0
    %396 = vmatprep.subr.mxu0 0.0
    %397 = vmatpush1.msra.mxu0 0.0
    %398 = vmatprep.subr.mxu0 0.0
    %399 = vmatpush1.msra.mxu0 0.0
    %400 = vmatprep.subr.mxu0 0.0
    %401 = vmatpush1.msra.mxu0 0.0
    %402 = vmatprep.subr.mxu0 0.0
    %403 = vmatpush1.msra.mxu0 0.0
    %404 = vmatprep.subr.mxu0 0.0
    %405 = vmatpush1.msra.mxu0 0.0
    %406 = vmatprep.subr.mxu0 0.0
    %407 = vmatpush1.msra.mxu0 0.0
    %408 = vmatprep.subr.mxu0 0.0
    %409 = vmatpush1.msra.mxu0 0.0
    %410 = vmatprep.mubr.f32.mxu0 0.0
    %411 = vmatmul.mubr.f32.gmra.mrb[0].mxu0 %v335
    %v412 = vpop.f32.mrb[0].mxu0
    %v413 = vadd.f32 %v316, %v412
    %v414 = vpop.f32.mrb[0].mxu0
    %415 = vmatprep.mubr.f32.mxu0 0.0
    %416 = vmatmul.mubr.f32.gmra.mrb[0].mxu0 %v338
    %v417 = vpop.f32.mrb[0].mxu0
    %v418 = vadd.f32 %v321, %v417
    %v419 = vpop.f32.mrb[0].mxu0
    %420 = vmatprep.mubr.f32.mxu0 0.0
    %421 = vmatmul.mubr.f32.gmra.mrb[0].mxu0 %v341
    %v422 = vpop.f32.mrb[0].mxu0
    %v423 = vadd.f32 %v326, %v422
    %v424 = vpop.f32.mrb[0].mxu0
    %425 = vmatprep.mubr.f32.mxu0 0.0
    %426 = vmatmul.mubr.f32.gmra.mrb[0].mxu0 %v344
    %v427 = vpop.f32.mrb[0].mxu0
    %v428 = vadd.f32 %v331, %v427
    %v429 = vpop.f32.mrb[0].mxu0
    %430 = vdwg.mxu0
    %v431 = vld [vmem:[%s1 + $0x58] sm:$0xff]
    %v432 = vld [vmem:[%s1 + $0x60] sm:$0xff]
    %v433 = vld [vmem:[%s1 + $0x68] sm:$0xff]
    %v434 = vld [vmem:[%s1 + $0x70] sm:$0xff]
    %v436 = vsel %vm236, %v224, 0
    %v439 = vsel %vm236, %v225, 0
    %v442 = vsel %vm236, %v226, 0
    %v445 = vsel %vm236, %v227, 0
    %447 = vmatprep.subr.mxu0 0.0
    %448 = vmatpush1.msra.mxu0 %v431
    %449 = vmatprep.subr.mxu0 0.0
    %450 = vmatpush1.msra.mxu0 %v432
    %451 = vmatprep.subr.mxu0 0.0
    %452 = vmatpush1.msra.mxu0 %v433
    %453 = vmatprep.subr.mxu0 0.0
    %454 = vmatpush1.msra.mxu0 %v434
    %455 = vmatprep.subr.mxu0 0.0
    %456 = vmatpush1.msra.mxu0 0.0
    %457 = vmatprep.subr.mxu0 0.0
    %458 = vmatpush1.msra.mxu0 0.0
    %459 = vmatprep.subr.mxu0 0.0
    %460 = vmatpush1.msra.mxu0 0.0
    %461 = vmatprep.subr.mxu0 0.0
    %462 = vmatpush1.msra.mxu0 0.0
    %463 = vmatprep.subr.mxu0 0.0
    %464 = vmatpush1.msra.mxu0 0.0
    %465 = vmatprep.subr.mxu0 0.0
    %466 = vmatpush1.msra.mxu0 0.0
    %467 = vmatprep.subr.mxu0 0.0
    %468 = vmatpush1.msra.mxu0 0.0
    %469 = vmatprep.subr.mxu0 0.0
    %470 = vmatpush1.msra.mxu0 0.0
    %471 = vmatprep.subr.mxu0 0.0
    %472 = vmatpush1.msra.mxu0 0.0
    %473 = vmatprep.subr.mxu0 0.0
    %474 = vmatpush1.msra.mxu0 0.0
    %475 = vmatprep.subr.mxu0 0.0
    %476 = vmatpush1.msra.mxu0 0.0
    %477 = vmatprep.subr.mxu0 0.0
    %478 = vmatpush1.msra.mxu0 0.0
    %479 = vmatprep.subr.mxu0 0.0
    %480 = vmatpush1.msra.mxu0 0.0
    %481 = vmatprep.subr.mxu0 0.0
    %482 = vmatpush1.msra.mxu0 0.0
    %483 = vmatprep.subr.mxu0 0.0
    %484 = vmatpush1.msra.mxu0 0.0
    %485 = vmatprep.subr.mxu0 0.0
    %486 = vmatpush1.msra.mxu0 0.0
    %487 = vmatprep.subr.mxu0 0.0
    %488 = vmatpush1.msra.mxu0 0.0
    %489 = vmatprep.subr.mxu0 0.0
    %490 = vmatpush1.msra.mxu0 0.0
    %491 = vmatprep.subr.mxu0 0.0
    %492 = vmatpush1.msra.mxu0 0.0
    %493 = vmatprep.subr.mxu0 0.0
    %494 = vmatpush1.msra.mxu0 0.0
    %495 = vmatprep.subr.mxu0 0.0
    %496 = vmatpush1.msra.mxu0 0.0
    %497 = vmatprep.subr.mxu0 0.0
    %498 = vmatpush1.msra.mxu0 0.0
    %499 = vmatprep.subr.mxu0 0.0
    %500 = vmatpush1.msra.mxu0 0.0
    %501 = vmatprep.subr.mxu0 0.0
    %502 = vmatpush1.msra.mxu0 0.0
    %503 = vmatprep.subr.mxu0 0.0
    %504 = vmatpush1.msra.mxu0 0.0
    %505 = vmatprep.subr.mxu0 0.0
    %506 = vmatpush1.msra.mxu0 0.0
    %507 = vmatprep.subr.mxu0 0.0
    %508 = vmatpush1.msra.mxu0 0.0
    %509 = vmatprep.subr.mxu0 0.0
    %510 = vmatpush1.msra.mxu0 0.0
    %511 = vmatprep.mubr.f32.mxu0 0.0
    %512 = vmatmul.mubr.f32.gmra.mrb[0].mxu0 %v436
    %v513 = vpop.f32.mrb[0].mxu0
    %v514 = vadd.f32 0.0, %v513
    %v515 = vpop.f32.mrb[0].mxu0
    %516 = vmatprep.mubr.f32.mxu0 0.0
    %517 = vmatmul.mubr.f32.gmra.mrb[0].mxu0 %v439
    %v518 = vpop.f32.mrb[0].mxu0
    %v519 = vadd.f32 0.0, %v518
    %v520 = vpop.f32.mrb[0].mxu0
    %521 = vmatprep.mubr.f32.mxu0 0.0
    %522 = vmatmul.mubr.f32.gmra.mrb[0].mxu0 %v442
    %v523 = vpop.f32.mrb[0].mxu0
    %v524 = vadd.f32 0.0, %v523
    %v525 = vpop.f32.mrb[0].mxu0
    %526 = vmatprep.mubr.f32.mxu0 0.0
    %527 = vmatmul.mubr.f32.gmra.mrb[0].mxu0 %v445
    %v528 = vpop.f32.mrb[0].mxu0
    %v529 = vadd.f32 0.0, %v528
    %v530 = vpop.f32.mrb[0].mxu0
    %531 = vdwg.mxu0
    %v532 = vadd.f32 %v413, %v514
    %v533 = vadd.f32 %v418, %v519
    %v534 = vadd.f32 %v423, %v524
    %v535 = vadd.f32 %v428, %v529
    %v536 = vld [vmem:[%s1 + $0x78] sm:$0x1]
    %v537 = vlaneseq
    %v538 = vshrl.u32 %v537, 7
    %v539 = vsub.s32 0, %v538
    %v540 = vrot.slane %v536, %v539
    %v541 = vadd.f32 %v532, %v540
    %v542 = vadd.f32 %v533, %v540
    %v543 = vadd.f32 %v534, %v540
    %v544 = vadd.f32 %v535, %v540
    %v545 = vmax.f32 %v541, 0.0
    %v546 = vmax.f32 %v542, 0.0
    %v547 = vmax.f32 %v543, 0.0
    %v548 = vmax.f32 %v544, 0.0
    %v549 = vrot.slane %v545, 7
    %v550 = vrot.slane %v546, 7
    %v551 = vrot.slane %v547, 7
    %v552 = vrot.slane %v548, 7
    %v553 = vsel %vm190, %v551, %v552
    %v554 = vsel %vm190, %v550, %v551
    %v555 = vsel %vm190, %v549, %v550
    %v556 = vsel %vm190, %v552, %v549
    %v557 = vsel %vm199, %v556, 0.0
    %v558 = vsel %vm200, %v555, 0.0
    %v559 = vsel %vm201, %v554, 0.0
    %v560 = vsel %vm202, %v553, 0.0
    %v561 = vrot.slane %v545, 1
    %v562 = vrot.slane %v546, 1
    %v563 = vrot.slane %v547, 1
    %v564 = vrot.slane %v548, 1
    %v565 = vsel %vm211, %v563, %v564
    %v566 = vsel %vm211, %v562, %v563
    %v567 = vsel %vm211, %v561, %v562
    %v568 = vsel %vm211, %v564, %v561
    %v569 = vsel %vm220, %v567, 0.0
    %v570 = vsel %vm221, %v566, 0.0
    %v571 = vsel %vm222, %v565, 0.0
    %v572 = vsel %vm223, %v568, 0.0
    %v573 = vld [vmem:[%s1 + $0x80] sm:$0xff]
    %v574 = vld [vmem:[%s1 + $0x88] sm:$0xff]
    %v575 = vld [vmem:[%s1 + $0x90] sm:$0xff]
    %v576 = vld [vmem:[%s1 + $0x98] sm:$0xff]
    %v577 = vld [vmem:[%s1 + $0xa0] sm:$0xff]
    %v578 = vld [vmem:[%s1 + $0xa8] sm:$0xff]
    %v579 = vld [vmem:[%s1 + $0xb0] sm:$0xff]
    %v580 = vld [vmem:[%s1 + $0xb8] sm:$0xff]
    %v582 = vsel %vm236, %v545, 0
    %v585 = vsel %vm236, %v546, 0
    %v588 = vsel %vm236, %v547, 0
    %v591 = vsel %vm236, %v548, 0
    %593 = vmatprep.subr.mxu0 0.0
    %594 = vmatpush1.msra.mxu0 %v577
    %595 = vmatprep.subr.mxu0 0.0
    %596 = vmatpush1.msra.mxu0 %v578
    %597 = vmatprep.subr.mxu0 0.0
    %598 = vmatpush1.msra.mxu0 %v579
    %599 = vmatprep.subr.mxu0 0.0
    %600 = vmatpush1.msra.mxu0 %v580
    %601 = vmatprep.subr.mxu0 0.0
    %602 = vmatpush1.msra.mxu0 0.0
    %603 = vmatprep.subr.mxu0 0.0
    %604 = vmatpush1.msra.mxu0 0.0
    %605 = vmatprep.subr.mxu0 0.0
    %606 = vmatpush1.msra.mxu0 0.0
    %607 = vmatprep.subr.mxu0 0.0
    %608 = vmatpush1.msra.mxu0 0.0
    %609 = vmatprep.subr.mxu0 0.0
    %610 = vmatpush1.msra.mxu0 0.0
    %611 = vmatprep.subr.mxu0 0.0
    %612 = vmatpush1.msra.mxu0 0.0
    %613 = vmatprep.subr.mxu0 0.0
    %614 = vmatpush1.msra.mxu0 0.0
    %615 = vmatprep.subr.mxu0 0.0
    %616 = vmatpush1.msra.mxu0 0.0
    %617 = vmatprep.subr.mxu0 0.0
    %618 = vmatpush1.msra.mxu0 0.0
    %619 = vmatprep.subr.mxu0 0.0
    %620 = vmatpush1.msra.mxu0 0.0
    %621 = vmatprep.subr.mxu0 0.0
    %622 = vmatpush1.msra.mxu0 0.0
    %623 = vmatprep.subr.mxu0 0.0
    %624 = vmatpush1.msra.mxu0 0.0
    %625 = vmatprep.subr.mxu0 0.0
    %626 = vmatpush1.msra.mxu0 0.0
    %627 = vmatprep.subr.mxu0 0.0
    %628 = vmatpush1.msra.mxu0 0.0
    %629 = vmatprep.subr.mxu0 0.0
    %630 = vmatpush1.msra.mxu0 0.0
    %631 = vmatprep.subr.mxu0 0.0
    %632 = vmatpush1.msra.mxu0 0.0
    %633 = vmatprep.subr.mxu0 0.0
    %634 = vmatpush1.msra.mxu0 0.0
    %635 = vmatprep.subr.mxu0 0.0
    %636 = vmatpush1.msra.mxu0 0.0
    %637 = vmatprep.subr.mxu0 0.0
    %638 = vmatpush1.msra.mxu0 0.0
    %639 = vmatprep.subr.mxu0 0.0
    %640 = vmatpush1.msra.mxu0 0.0
    %641 = vmatprep.subr.mxu0 0.0
    %642 = vmatpush1.msra.mxu0 0.0
    %643 = vmatprep.subr.mxu0 0.0
    %644 = vmatpush1.msra.mxu0 0.0
    %645 = vmatprep.subr.mxu0 0.0
    %646 = vmatpush1.msra.mxu0 0.0
    %647 = vmatprep.subr.mxu0 0.0
    %648 = vmatpush1.msra.mxu0 0.0
    %649 = vmatprep.subr.mxu0 0.0
    %650 = vmatpush1.msra.mxu0 0.0
    %651 = vmatprep.subr.mxu0 0.0
    %652 = vmatpush1.msra.mxu0 0.0
    %653 = vmatprep.subr.mxu0 0.0
    %654 = vmatpush1.msra.mxu0 0.0
    %655 = vmatprep.subr.mxu0 0.0
    %656 = vmatpush1.msra.mxu0 0.0
    %657 = vmatprep.mubr.f32.mxu0 0.0
    %658 = vmatmul.mubr.f32.gmra.mrb[0].mxu0 %v582
    %v659 = vpop.f32.mrb[0].mxu0
    %v660 = vadd.f32 0.0, %v659
    %v661 = vpop.f32.mrb[0].mxu0
    %662 = vmatprep.mubr.f32.mxu0 0.0
    %663 = vmatmul.mubr.f32.gmra.mrb[0].mxu0 %v585
    %v664 = vpop.f32.mrb[0].mxu0
    %v665 = vadd.f32 0.0, %v664
    %v666 = vpop.f32.mrb[0].mxu0
    %667 = vmatprep.mubr.f32.mxu0 0.0
    %668 = vmatmul.mubr.f32.gmra.mrb[0].mxu0 %v588
    %v669 = vpop.f32.mrb[0].mxu0
    %v670 = vadd.f32 0.0, %v669
    %v671 = vpop.f32.mrb[0].mxu0
    %672 = vmatprep.mubr.f32.mxu0 0.0
    %673 = vmatmul.mubr.f32.gmra.mrb[0].mxu0 %v591
    %v674 = vpop.f32.mrb[0].mxu0
    %v675 = vadd.f32 0.0, %v674
    %v676 = vpop.f32.mrb[0].mxu0
    %677 = vdwg.mxu0
    %v679 = vsel %vm236, %v557, 0
    %v682 = vsel %vm236, %v558, 0
    %v685 = vsel %vm236, %v559, 0
    %v688 = vsel %vm236, %v560, 0
    %690 = vmatprep.subr.mxu0 0.0
    %691 = vmatpush1.msra.mxu0 %v573
    %692 = vmatprep.subr.mxu0 0.0
    %693 = vmatpush1.msra.mxu0 %v574
    %694 = vmatprep.subr.mxu0 0.0
    %695 = vmatpush1.msra.mxu0 %v575
    %696 = vmatprep.subr.mxu0 0.0
    %697 = vmatpush1.msra.mxu0 %v576
    %698 = vmatprep.subr.mxu0 0.0
    %699 = vmatpush1.msra.mxu0 0.0
    %700 = vmatprep.subr.mxu0 0.0
    %701 = vmatpush1.msra.mxu0 0.0
    %702 = vmatprep.subr.mxu0 0.0
    %703 = vmatpush1.msra.mxu0 0.0
    %704 = vmatprep.subr.mxu0 0.0
    %705 = vmatpush1.msra.mxu0 0.0
    %706 = vmatprep.subr.mxu0 0.0
    %707 = vmatpush1.msra.mxu0 0.0
    %708 = vmatprep.subr.mxu0 0.0
    %709 = vmatpush1.msra.mxu0 0.0
    %710 = vmatprep.subr.mxu0 0.0
    %711 = vmatpush1.msra.mxu0 0.0
    %712 = vmatprep.subr.mxu0 0.0
    %713 = vmatpush1.msra.mxu0 0.0
    %714 = vmatprep.subr.mxu0 0.0
    %715 = vmatpush1.msra.mxu0 0.0
    %716 = vmatprep.subr.mxu0 0.0
    %717 = vmatpush1.msra.mxu0 0.0
    %718 = vmatprep.subr.mxu0 0.0
    %719 = vmatpush1.msra.mxu0 0.0
    %720 = vmatprep.subr.mxu0 0.0
    %721 = vmatpush1.msra.mxu0 0.0
    %722 = vmatprep.subr.mxu0 0.0
    %723 = vmatpush1.msra.mxu0 0.0
    %724 = vmatprep.subr.mxu0 0.0
    %725 = vmatpush1.msra.mxu0 0.0
    %726 = vmatprep.subr.mxu0 0.0
    %727 = vmatpush1.msra.mxu0 0.0
    %728 = vmatprep.subr.mxu0 0.0
    %729 = vmatpush1.msra.mxu0 0.0
    %730 = vmatprep.subr.mxu0 0.0
    %731 = vmatpush1.msra.mxu0 0.0
    %732 = vmatprep.subr.mxu0 0.0
    %733 = vmatpush1.msra.mxu0 0.0
    %734 = vmatprep.subr.mxu0 0.0
    %735 = vmatpush1.msra.mxu0 0.0
    %736 = vmatprep.subr.mxu0 0.0
    %737 = vmatpush1.msra.mxu0 0.0
    %738 = vmatprep.subr.mxu0 0.0
    %739 = vmatpush1.msra.mxu0 0.0
    %740 = vmatprep.subr.mxu0 0.0
    %741 = vmatpush1.msra.mxu0 0.0
    %742 = vmatprep.subr.mxu0 0.0
    %743 = vmatpush1.msra.mxu0 0.0
    %744 = vmatprep.subr.mxu0 0.0
    %745 = vmatpush1.msra.mxu0 0.0
    %746 = vmatprep.subr.mxu0 0.0
    %747 = vmatpush1.msra.mxu0 0.0
    %748 = vmatprep.subr.mxu0 0.0
    %749 = vmatpush1.msra.mxu0 0.0
    %750 = vmatprep.subr.mxu0 0.0
    %751 = vmatpush1.msra.mxu0 0.0
    %752 = vmatprep.subr.mxu0 0.0
    %753 = vmatpush1.msra.mxu0 0.0
    %754 = vmatprep.mubr.f32.mxu0 0.0
    %755 = vmatmul.mubr.f32.gmra.mrb[0].mxu0 %v679
    %v756 = vpop.f32.mrb[0].mxu0
    %v757 = vadd.f32 %v660, %v756
    %v758 = vpop.f32.mrb[0].mxu0
    %759 = vmatprep.mubr.f32.mxu0 0.0
    %760 = vmatmul.mubr.f32.gmra.mrb[0].mxu0 %v682
    %v761 = vpop.f32.mrb[0].mxu0
    %v762 = vadd.f32 %v665, %v761
    %v763 = vpop.f32.mrb[0].mxu0
    %764 = vmatprep.mubr.f32.mxu0 0.0
    %765 = vmatmul.mubr.f32.gmra.mrb[0].mxu0 %v685
    %v766 = vpop.f32.mrb[0].mxu0
    %v767 = vadd.f32 %v670, %v766
    %v768 = vpop.f32.mrb[0].mxu0
    %769 = vmatprep.mubr.f32.mxu0 0.0
    %770 = vmatmul.mubr.f32.gmra.mrb[0].mxu0 %v688
    %v771 = vpop.f32.mrb[0].mxu0
    %v772 = vadd.f32 %v675, %v771
    %v773 = vpop.f32.mrb[0].mxu0
    %774 = vdwg.mxu0
    %v775 = vld [vmem:[%s1 + $0xc0] sm:$0xff]
    %v776 = vld [vmem:[%s1 + $0xc8] sm:$0xff]
    %v777 = vld [vmem:[%s1 + $0xd0] sm:$0xff]
    %v778 = vld [vmem:[%s1 + $0xd8] sm:$0xff]
    %v780 = vsel %vm236, %v569, 0
    %v783 = vsel %vm236, %v570, 0
    %v786 = vsel %vm236, %v571, 0
    %v789 = vsel %vm236, %v572, 0
    %791 = vmatprep.subr.mxu0 0.0
    %792 = vmatpush1.msra.mxu0 %v775
    %793 = vmatprep.subr.mxu0 0.0
    %794 = vmatpush1.msra.mxu0 %v776
    %795 = vmatprep.subr.mxu0 0.0
    %796 = vmatpush1.msra.mxu0 %v777
    %797 = vmatprep.subr.mxu0 0.0
    %798 = vmatpush1.msra.mxu0 %v778
    %799 = vmatprep.subr.mxu0 0.0
    %800 = vmatpush1.msra.mxu0 0.0
    %801 = vmatprep.subr.mxu0 0.0
    %802 = vmatpush1.msra.mxu0 0.0
    %803 = vmatprep.subr.mxu0 0.0
    %804 = vmatpush1.msra.mxu0 0.0
    %805 = vmatprep.subr.mxu0 0.0
    %806 = vmatpush1.msra.mxu0 0.0
    %807 = vmatprep.subr.mxu0 0.0
    %808 = vmatpush1.msra.mxu0 0.0
    %809 = vmatprep.subr.mxu0 0.0
    %810 = vmatpush1.msra.mxu0 0.0
    %811 = vmatprep.subr.mxu0 0.0
    %812 = vmatpush1.msra.mxu0 0.0
    %813 = vmatprep.subr.mxu0 0.0
    %814 = vmatpush1.msra.mxu0 0.0
    %815 = vmatprep.subr.mxu0 0.0
    %816 = vmatpush1.msra.mxu0 0.0
    %817 = vmatprep.subr.mxu0 0.0
    %818 = vmatpush1.msra.mxu0 0.0
    %819 = vmatprep.subr.mxu0 0.0
    %820 = vmatpush1.msra.mxu0 0.0
    %821 = vmatprep.subr.mxu0 0.0
    %822 = vmatpush1.msra.mxu0 0.0
    %823 = vmatprep.subr.mxu0 0.0
    %824 = vmatpush1.msra.mxu0 0.0
    %825 = vmatprep.subr.mxu0 0.0
    %826 = vmatpush1.msra.mxu0 0.0
    %827 = vmatprep.subr.mxu0 0.0
    %828 = vmatpush1.msra.mxu0 0.0
    %829 = vmatprep.subr.mxu0 0.0
    %830 = vmatpush1.msra.mxu0 0.0
    %831 = vmatprep.subr.mxu0 0.0
    %832 = vmatpush1.msra.mxu0 0.0
    %833 = vmatprep.subr.mxu0 0.0
    %834 = vmatpush1.msra.mxu0 0.0
    %835 = vmatprep.subr.mxu0 0.0
    %836 = vmatpush1.msra.mxu0 0.0
    %837 = vmatprep.subr.mxu0 0.0
    %838 = vmatpush1.msra.mxu0 0.0
    %839 = vmatprep.subr.mxu0 0.0
    %840 = vmatpush1.msra.mxu0 0.0
    %841 = vmatprep.subr.mxu0 0.0
    %842 = vmatpush1.msra.mxu0 0.0
    %843 = vmatprep.subr.mxu0 0.0
    %844 = vmatpush1.msra.mxu0 0.0
    %845 = vmatprep.subr.mxu0 0.0
    %846 = vmatpush1.msra.mxu0 0.0
    %847 = vmatprep.subr.mxu0 0.0
    %848 = vmatpush1.msra.mxu0 0.0
    %849 = vmatprep.subr.mxu0 0.0
    %850 = vmatpush1.msra.mxu0 0.0
    %851 = vmatprep.subr.mxu0 0.0
    %852 = vmatpush1.msra.mxu0 0.0
    %853 = vmatprep.subr.mxu0 0.0
    %854 = vmatpush1.msra.mxu0 0.0
    %855 = vmatprep.mubr.f32.mxu0 0.0
    %856 = vmatmul.mubr.f32.gmra.mrb[0].mxu0 %v780
    %v857 = vpop.f32.mrb[0].mxu0
    %v858 = vadd.f32 0.0, %v857
    %v859 = vpop.f32.mrb[0].mxu0
    %860 = vmatprep.mubr.f32.mxu0 0.0
    %861 = vmatmul.mubr.f32.gmra.mrb[0].mxu0 %v783
    %v862 = vpop.f32.mrb[0].mxu0
    %v863 = vadd.f32 0.0, %v862
    %v864 = vpop.f32.mrb[0].mxu0
    %865 = vmatprep.mubr.f32.mxu0 0.0
    %866 = vmatmul.mubr.f32.gmra.mrb[0].mxu0 %v786
    %v867 = vpop.f32.mrb[0].mxu0
    %v868 = vadd.f32 0.0, %v867
    %v869 = vpop.f32.mrb[0].mxu0
    %870 = vmatprep.mubr.f32.mxu0 0.0
    %871 = vmatmul.mubr.f32.gmra.mrb[0].mxu0 %v789
    %v872 = vpop.f32.mrb[0].mxu0
    %v873 = vadd.f32 0.0, %v872
    %v874 = vpop.f32.mrb[0].mxu0
    %875 = vdwg.mxu0
    %v876 = vadd.f32 %v757, %v858
    %v877 = vadd.f32 %v762, %v863
    %v878 = vadd.f32 %v767, %v868
    %v879 = vadd.f32 %v772, %v873
    %v880 = vld [vmem:[%s1 + $0xe0] sm:$0x1]
    %v881 = vlaneseq
    %v882 = vshrl.u32 %v881, 7
    %v883 = vsub.s32 0, %v882
    %v884 = vrot.slane %v880, %v883
    %v885 = vadd.f32 %v876, %v884
    %v886 = vadd.f32 %v877, %v884
    %v887 = vadd.f32 %v878, %v884
    %v888 = vadd.f32 %v879, %v884
    %v889 = vadd.f32 %v885, %v103
    %v890 = vadd.f32 %v886, %v108
    %v891 = vadd.f32 %v887, %v113
    %v892 = vadd.f32 %v888, %v118
    %v893 = vld [vmem:[%s1 + $0xe8] sm:$0x3]
    %v895 = vsel %vm236, %v893, 0
    %897 = vmatprep.subr.mxu0 0.0
    %898 = vmatpush1.msra.mxu0 %v889
    %899 = vmatprep.subr.mxu0 0.0
    %900 = vmatpush1.msra.mxu0 %v890
    %901 = vmatprep.subr.mxu0 0.0
    %902 = vmatpush1.msra.mxu0 %v891
    %903 = vmatprep.subr.mxu0 0.0
    %904 = vmatpush1.msra.mxu0 %v892
    %905 = vmatprep.subr.mxu0 0.0
    %906 = vmatpush1.msra.mxu0 0.0
    %907 = vmatprep.subr.mxu0 0.0
    %908 = vmatpush1.msra.mxu0 0.0
    %909 = vmatprep.subr.mxu0 0.0
    %910 = vmatpush1.msra.mxu0 0.0
    %911 = vmatprep.subr.mxu0 0.0
    %912 = vmatpush1.msra.mxu0 0.0
    %913 = vmatprep.subr.mxu0 0.0
    %914 = vmatpush1.msra.mxu0 0.0
    %915 = vmatprep.subr.mxu0 0.0
    %916 = vmatpush1.msra.mxu0 0.0
    %917 = vmatprep.subr.mxu0 0.0
    %918 = vmatpush1.msra.mxu0 0.0
    %919 = vmatprep.subr.mxu0 0.0
    %920 = vmatpush1.msra.mxu0 0.0
    %921 = vmatprep.subr.mxu0 0.0
    %922 = vmatpush1.msra.mxu0 0.0
    %923 = vmatprep.subr.mxu0 0.0
    %924 = vmatpush1.msra.mxu0 0.0
    %925 = vmatprep.subr.mxu0 0.0
    %926 = vmatpush1.msra.mxu0 0.0
    %927 = vmatprep.subr.mxu0 0.0
    %928 = vmatpush1.msra.mxu0 0.0
    %929 = vmatprep.subr.mxu0 0.0
    %930 = vmatpush1.msra.mxu0 0.0
    %931 = vmatprep.subr.mxu0 0.0
    %932 = vmatpush1.msra.mxu0 0.0
    %933 = vmatprep.subr.mxu0 0.0
    %934 = vmatpush1.msra.mxu0 0.0
    %935 = vmatprep.subr.mxu0 0.0
    %936 = vmatpush1.msra.mxu0 0.0
    %937 = vmatprep.subr.mxu0 0.0
    %938 = vmatpush1.msra.mxu0 0.0
    %939 = vmatprep.subr.mxu0 0.0
    %940 = vmatpush1.msra.mxu0 0.0
    %941 = vmatprep.subr.mxu0 0.0
    %942 = vmatpush1.msra.mxu0 0.0
    %943 = vmatprep.subr.mxu0 0.0
    %944 = vmatpush1.msra.mxu0 0.0
    %945 = vmatprep.subr.mxu0 0.0
    %946 = vmatpush1.msra.mxu0 0.0
    %947 = vmatprep.subr.mxu0 0.0
    %948 = vmatpush1.msra.mxu0 0.0
    %949 = vmatprep.subr.mxu0 0.0
    %950 = vmatpush1.msra.mxu0 0.0
    %951 = vmatprep.subr.mxu0 0.0
    %952 = vmatpush1.msra.mxu0 0.0
    %953 = vmatprep.subr.mxu0 0.0
    %954 = vmatpush1.msra.mxu0 0.0
    %955 = vmatprep.subr.mxu0 0.0
    %956 = vmatpush1.msra.mxu0 0.0
    %957 = vmatprep.subr.mxu0 0.0
    %958 = vmatpush1.msra.mxu0 0.0
    %959 = vmatprep.subr.mxu0 0.0
    %960 = vmatpush1.msra.mxu0 0.0
    %961 = vmatprep.mubr.f32.mxu0 0.0
    %962 = vmatmul.mubr.f32.gmra.mrb[0].mxu0 %v895
    %v963 = vpop.f32.mrb[0].mxu0
    %v964 = vadd.f32 0.0, %v963
    %v965 = vpop.f32.mrb[0].mxu0
    %966 = vdwg.mxu0
    %vm967 = vcmask 254976
    %968 = vst.msk [vmem:[#allocation2] sm:$0x3] %vm967, %v964
    // Predicated region
    $region10: #{resnet_forward.1} parent=1 // pred_check
      _
    $region11: #{resnet_forward.1} parent=1 // pred_check_branch
      %970 = sbr.rel (0) target = $region13
    $region12: #{resnet_forward.1} parent=1 // pred_region
      %s972 = ssub.s32 32, 32
      %973 = vsyncadd [#allocation3], %s972
      %s975 = sshll.u32 [#allocation2], 4
      %s976 = int_to_ptr.vmem [resolvable:$true] %s975
      %978 = dma.vmem_to_hbm [thread:$0]  %s976, 32, %s2, [#allocation3]
    $region13: #{resnet_forward.1} parent=1 // pred_fallthru
      _
    // Predicated region
    $region14: #{resnet_forward.1} parent=1 // pred_check
      _
    $region15: #{resnet_forward.1} parent=1 // pred_check_branch
      %980 = sbr.rel (0) target = $region17
    $region16: #{resnet_forward.1} parent=1 // pred_region
      %981 = dma.done [#allocation3], 32
    $region17: #{resnet_forward.1} parent=1 // pred_fallthru
      _
    %982 = vsyncpa [#allocation3], 1

</llo_original>
